<compile_context>
chip_gen: v7x
topology: tpu7x:2x2x1
jax: 0.10.0
libtpu: 0.0.40
codegen_flags: <defaults>
</compile_context>

<pallas_src>
import functools

import jax
import jax.numpy as jnp
from jax import lax
from jax.experimental import pallas as pl
from jax.experimental.pallas import tpu as pltpu


# ---------------------------------------------------------------------------
# Kernel 1: fused ReLU + sub-pixel deconv GEMM + per-channel sum / sum-of-squares
# ---------------------------------------------------------------------------
def _conv_stats_kernel(p_ref, w_ref, out_ref, sum_ref, sumsq_ref):
    # axis 0 = core split ("parallel"), axis 1 = row tiles ("arbitrary", stats
    # accumulate across it into the per-core (8, P) stat tile).
    @pl.when(pl.program_id(1) == 0)
    def _():
        sum_ref[...] = jnp.zeros_like(sum_ref)
        sumsq_ref[...] = jnp.zeros_like(sumsq_ref)

    # ReLU on the patches == ReLU on the input (im2col only rearranges elements;
    # padding zeros are fixed points of ReLU).
    p = jnp.maximum(p_ref[...], 0.0)
    y = jnp.dot(p, w_ref[...], preferred_element_type=jnp.float32)
    out_ref[...] = y
    # (1, P) tile-sums broadcast over the 8 sublanes of the stat tile (kept
    # 8 rows tall so the block obeys the (8, 128) tiling rule); all rows end up
    # identical, the wrapper reads row 0.
    sum_ref[...] += jnp.sum(y, axis=0, keepdims=True)
    sumsq_ref[...] += jnp.sum(y * y, axis=0, keepdims=True)


# ---------------------------------------------------------------------------
# Kernel 2: BatchNorm as a single fused scale/shift on a lane-dense view
# ---------------------------------------------------------------------------
def _bn_kernel(y_ref, scale_ref, shift_ref, o_ref):
    o_ref[...] = y_ref[...] * scale_ref[...] + shift_ref[...]


# ---------------------------------------------------------------------------
# Wrapper
# ---------------------------------------------------------------------------
def _round_up(a, b):
    return (a + b - 1) // b * b


def _f32_bytes(*shape):
    n = 1
    for d in shape:
        n *= int(d)
    return 4 * n


def decoder_block_forward(x, weight, bias, gamma, beta,
                          *, kernel_size=4, stride=2, padding=1, eps=1e-5,
                          tile_m=512):
    """x: [N, Cin, H, W] f32; weight: [Cin, Cout, 4, 4] (ConvTranspose2d layout)."""
    del bias  # BN with batch statistics is invariant to the deconv bias.
    assert (kernel_size, stride, padding) == (4, 2, 1), \
        "sub-pixel decomposition is specialised to kernel=4, stride=2, padding=1"
    N, Cin, H, W = x.shape
    Cout = weight.shape[1]
    Hout, Wout = 2 * H, 2 * W

    # ---- sub-pixel weights: output parity (ph, pw) uses a 2x2 subset of the ----
    # ---- 3x3 input neighbourhood.  taps[(parity, d)] = original kernel tap. ----
    taps = {(0, 0): 3, (0, 1): 1, (1, 1): 2, (1, 2): 0}
    w_sub = jnp.zeros((Cin, 3, 3, 2, 2, Cout), weight.dtype)
    for (ph, dh), kh in taps.items():
        for (pw, dw), kw in taps.items():
            w_sub = w_sub.at[:, dh, dw, ph, pw, :].set(weight[:, :, kh, kw])
    Kd = Cin * 9           # GEMM contraction dim (vs Cin*16 for dilated im2col)
    P = 4 * Cout           # parity-expanded output channels (GEMM lane dim)
    w_mat = w_sub.reshape(Kd, P)

    # ---- 3x3 patches of the un-dilated input, channel-last ---------------------
    x_nhwc = jnp.transpose(x, (0, 2, 3, 1))
    x_padded = jnp.pad(x_nhwc, ((0, 0), (1, 1), (1, 1), (0, 0)))
    patches = jnp.stack(
        [x_padded[:, dh:dh + H, dw:dw + W, :] for dh in range(3) for dw in range(3)],
        axis=-1)                                    # [N, H, W, Cin, 9]
    M = N * H * W
    patches = patches.reshape(M, Kd)

    # ---- row tiling / zero padding (padded rows add 0 to sum and sumsq) --------
    tile_m = _round_up(max(8, min(tile_m, M)), 8)
    M_pad = _round_up(M, tile_m)
    if M_pad != M:
        patches = jnp.pad(patches, ((0, M_pad - M), (0, 0)))
    grid_m = M_pad // tile_m
    n_split = 2 if grid_m % 2 == 0 else 1       # shard over v7x's 2 TensorCores
    grid_inner = grid_m // n_split

    # VMEM budget (double-buffered streaming tiles + resident weight/stat tiles),
    # clamped to 32 MiB so it also fits v7x's smaller VMEM with headroom.
    k1_need = (2 * (_f32_bytes(tile_m, Kd) + _f32_bytes(tile_m, P))
               + 2 * _f32_bytes(Kd, P) + 4 * _f32_bytes(8, P))
    vmem1 = int(min(32 * 1024 * 1024, max(4 * 1024 * 1024, 2 * k1_need)))

    conv_out, ch_sum, ch_sumsq = pl.pallas_call(
        _conv_stats_kernel,
        out_shape=(
            jax.ShapeDtypeStruct((M_pad, P), jnp.float32),
            jax.ShapeDtypeStruct((8 * n_split, P), jnp.float32),
            jax.ShapeDtypeStruct((8 * n_split, P), jnp.float32),
        ),
        grid_spec=pltpu.PrefetchScalarGridSpec(
            num_scalar_prefetch=0,
            grid=(n_split, grid_inner),
            in_specs=[
                pl.BlockSpec((tile_m, Kd), lambda c, i: (c * grid_inner + i, 0)),
                pl.BlockSpec((Kd, P), lambda c, i: (0, 0)),
            ],
            out_specs=[
                pl.BlockSpec((tile_m, P), lambda c, i: (c * grid_inner + i, 0)),
                pl.BlockSpec((8, P), lambda c, i: (c, 0)),   # per-core partial sums
                pl.BlockSpec((8, P), lambda c, i: (c, 0)),
            ],
        ),
        compiler_params=pltpu.CompilerParams(
            dimension_semantics=("parallel", "arbitrary"),
            vmem_limit_bytes=vmem1),
    )(patches, w_mat)

    # ---- batch statistics (biased variance, BN training mode); mean / inv-std --
    # ---- hoisted out of the per-tile kernel and folded into scale / shift. -----
    count = float(M * 4)                               # = N * Hout * Wout (true count)
    sum_c = ch_sum.reshape(n_split, 8, P)[:, 0, :].sum(0).reshape(4, Cout).sum(0)
    sumsq_c = ch_sumsq.reshape(n_split, 8, P)[:, 0, :].sum(0).reshape(4, Cout).sum(0)
    mean = sum_c / count
    var = sumsq_c / count - mean * mean
    scale_c = gamma * lax.rsqrt(var + eps)
    shift_c = beta - mean * scale_c

    # ---- lane-dense BatchNorm: view [M_pad, P] as [M_pad/R, R*P] (R*P == 128) --
    R = 128 // P if (128 % P == 0 and tile_m % (8 * (128 // P)) == 0) else 1
    lanes = R * P
    rows = M_pad // R
    tile_r = tile_m // R
    y_view = conv_out.reshape(rows, lanes)             # free (row-major bitcast)
    scale_row = jnp.tile(scale_c, 4 * R).reshape(1, lanes)
    shift_row = jnp.tile(shift_c, 4 * R).reshape(1, lanes)

    k2_need = 4 * _f32_bytes(tile_r, lanes) + 4 * _f32_bytes(1, lanes)
    vmem2 = int(min(32 * 1024 * 1024, max(4 * 1024 * 1024, 2 * k2_need)))

    bn_out = pl.pallas_call(
        _bn_kernel,
        out_shape=jax.ShapeDtypeStruct((rows, lanes), jnp.float32),
        grid_spec=pltpu.PrefetchScalarGridSpec(
            num_scalar_prefetch=0,
            grid=(rows // tile_r,),
            in_specs=[
                pl.BlockSpec((tile_r, lanes), lambda i: (i, 0)),
                pl.BlockSpec((1, lanes), lambda i: (0, 0)),
                pl.BlockSpec((1, lanes), lambda i: (0, 0)),
            ],
            out_specs=pl.BlockSpec((tile_r, lanes), lambda i: (i, 0)),
        ),
        input_output_aliases={0: 0},                   # normalize in place
        compiler_params=pltpu.CompilerParams(
            dimension_semantics=("parallel",),
            vmem_limit_bytes=vmem2),
    )(y_view, scale_row, shift_row)

    # ---- pixel-shuffle the parities back into NCHW ------------------------------
    y = bn_out.reshape(M_pad, P)[:M]
    y = y.reshape(N, H, W, 2, 2, Cout).transpose(0, 5, 1, 3, 2, 4)
    return y.reshape(N, Cout, Hout, Wout)


# ---------------------------------------------------------------------------
# Pure-JAX reference (mirrors the PyTorch module, incl. the bias)
# ---------------------------------------------------------------------------
def decoder_block_reference(x, weight, bias, gamma, beta,
                            *, kernel_size=4, stride=2, padding=1, eps=1e-5):
    K = kernel_size
    fx = jnp.maximum(x, 0.0)
    # ConvTranspose2d == lhs-dilated correlation with spatially flipped, transposed kernel
    w_oihw = jnp.transpose(weight[:, :, ::-1, ::-1], (1, 0, 2, 3))  # [Cout, Cin, K, K]
    y = lax.conv_general_dilated(
        fx, w_oihw, window_strides=(1, 1),
        padding=[(K - 1 - padding, K - 1 - padding)] * 2,
        lhs_dilation=(stride, stride),
        dimension_numbers=("NCHW", "OIHW", "NCHW"))
    y = y + bias.reshape(1, -1, 1, 1)
    mean = jnp.mean(y, axis=(0, 2, 3), keepdims=True)
    var = jnp.mean((y - mean) ** 2, axis=(0, 2, 3), keepdims=True)  # biased (BN training)
    return (y - mean) / jnp.sqrt(var + eps) * gamma.reshape(1, -1, 1, 1) + beta.reshape(1, -1, 1, 1)


if __name__ == "__main__":
    # N=2, inplanes=4, outplanes=8, 16x16 spatial -> 32x32 output
    N, Cin, Cout, H, W, K = 2, 4, 8, 16, 16, 4

    key = jax.random.PRNGKey(0)
    kx, kw, kb = jax.random.split(key, 3)
    x = jax.random.normal(kx, (N, Cin, H, W), dtype=jnp.float32)
    weight = 0.1 * jax.random.normal(kw, (Cin, Cout, K, K), dtype=jnp.float32)  # ConvTranspose2d layout
    bias = 0.05 * jax.random.normal(kb, (Cout,), dtype=jnp.float32)
    gamma = jnp.ones((Cout,), dtype=jnp.float32)   # BatchNorm2d default affine init
    beta = jnp.zeros((Cout,), dtype=jnp.float32)

    # tile_m=256 so the small demo (M = N*H*W = 512 rows) still exercises the
    # 2-way core split; real shapes should use the default 512 (or larger).
    fwd = jax.jit(functools.partial(decoder_block_forward, tile_m=256))
    out = jax.block_until_ready(fwd(x, weight, bias, gamma, beta))

    ref = decoder_block_reference(x, weight, bias, gamma, beta)
    assert out.shape == (N, Cout, 2 * H, 2 * W), out.shape
    err = float(jnp.max(jnp.abs(out - ref)))
    assert jnp.allclose(out, ref, atol=2e-4, rtol=2e-4), err

    print("KERNEL_OK")
</pallas_src>

<mosaic_0001>
module attributes {stable_mosaic.version = 11 : i64} {
  func.func @_conv_stats_kernel(%arg0: i32, %arg1: i32, %arg2: memref<256x36xf32, #tpu.memory_space<vmem>>, %arg3: memref<36x32xf32, #tpu.memory_space<vmem>>, %arg4: memref<256x32xf32, #tpu.memory_space<vmem>>, %arg5: memref<8x32xf32, #tpu.memory_space<vmem>>, %arg6: memref<8x32xf32, #tpu.memory_space<vmem>>) attributes {dimension_semantics = [#tpu.dimension_semantics<parallel>, #tpu.dimension_semantics<arbitrary>], iteration_bounds = array<i64: 2, 1>, scalar_prefetch = 0 : i64, scratch_operands = 0 : i64, tpu.core_type = #tpu.core_type<tc>, window_params = [{transform_indices = @transform_0, window_bounds = array<i64: 256, 36>}, {pipeline_mode = #tpu.pipeline_mode<synchronous>, transform_indices = @transform_1, window_bounds = array<i64: 36, 32>}, {transform_indices = @transform_2, window_bounds = array<i64: 256, 32>}, {transform_indices = @transform_3, window_bounds = array<i64: 8, 32>}, {transform_indices = @transform_4, window_bounds = array<i64: 8, 32>}]} {
    %c0_i32 = arith.constant 0 : i32
    %0 = arith.cmpi eq, %arg1, %c0_i32 : i32
    %1 = arith.extui %0 : i1 to i32
    %c0_i32_0 = arith.constant 0 : i32
    %2 = arith.cmpi ne, %1, %c0_i32_0 : i32
    scf.if %2 {
      %cst_17 = arith.constant 0.000000e+00 : f32
      %22 = vector.broadcast %cst_17 : f32 to vector<8x32xf32>
      %c0_18 = arith.constant 0 : index
      %c0_19 = arith.constant 0 : index
      %23 = vector.load %arg5[%c0_18, %c0_19] : memref<8x32xf32, #tpu.memory_space<vmem>>, vector<8x32xf32>
      tpu.vector_store %arg5[%c0_18, %c0_19], %22 {strides = array<i32>} : memref<8x32xf32, #tpu.memory_space<vmem>>, vector<8x32xf32>,
      %cst_20 = arith.constant 0.000000e+00 : f32
      %24 = vector.broadcast %cst_20 : f32 to vector<8x32xf32>
      %c0_21 = arith.constant 0 : index
      %c0_22 = arith.constant 0 : index
      %25 = vector.load %arg6[%c0_21, %c0_22] : memref<8x32xf32, #tpu.memory_space<vmem>>, vector<8x32xf32>
      tpu.vector_store %arg6[%c0_21, %c0_22], %24 {strides = array<i32>} : memref<8x32xf32, #tpu.memory_space<vmem>>, vector<8x32xf32>,
    } else {
    }
    %c0 = arith.constant 0 : index
    %c0_1 = arith.constant 0 : index
    %3 = vector.load %arg2[%c0, %c0_1] : memref<256x36xf32, #tpu.memory_space<vmem>>, vector<256x36xf32>
    %cst = arith.constant 0.000000e+00 : f32
    %4 = vector.broadcast %cst : f32 to vector<256x36xf32>
    %5 = arith.maximumf %3, %4 : vector<256x36xf32>
    %c0_2 = arith.constant 0 : index
    %c0_3 = arith.constant 0 : index
    %6 = vector.load %arg3[%c0_2, %c0_3] : memref<36x32xf32, #tpu.memory_space<vmem>>, vector<36x32xf32>
    %cst_4 = arith.constant dense<0.000000e+00> : vector<256x32xf32>
    %7 = tpu.matmul %5, %6, %cst_4 {dimension_numbers = #tpu.dot_dimension_numbers<[1], [0], [0], [1], [0, 0, 1, 1], [], []>} : vector<256x36xf32>, vector<36x32xf32>, vector<256x32xf32> -> vector<256x32xf32>
    %c0_5 = arith.constant 0 : index
    %c0_6 = arith.constant 0 : index
    %8 = vector.load %arg4[%c0_5, %c0_6] : memref<256x32xf32, #tpu.memory_space<vmem>>, vector<256x32xf32>
    tpu.vector_store %arg4[%c0_5, %c0_6], %7 {strides = array<i32>} : memref<256x32xf32, #tpu.memory_space<vmem>>, vector<256x32xf32>,
    %c0_7 = arith.constant 0 : index
    %c0_8 = arith.constant 0 : index
    %9 = vector.load %arg5[%c0_7, %c0_8] : memref<8x32xf32, #tpu.memory_space<vmem>>, vector<8x32xf32>
    %cst_9 = arith.constant dense<0.000000e+00> : vector<32xf32>
    %10 = vector.multi_reduction <add>, %7, %cst_9 [0] : vector<256x32xf32> to vector<32xf32>
    %11 = vector.shape_cast %10 : vector<32xf32> to vector<1x32xf32>
    %12 = vector.broadcast %11 : vector<1x32xf32> to vector<8x32xf32>
    %13 = arith.addf %9, %12 : vector<8x32xf32>
    %c0_10 = arith.constant 0 : index
    %c0_11 = arith.constant 0 : index
    %14 = vector.load %arg5[%c0_10, %c0_11] : memref<8x32xf32, #tpu.memory_space<vmem>>, vector<8x32xf32>
    tpu.vector_store %arg5[%c0_10, %c0_11], %13 {strides = array<i32>} : memref<8x32xf32, #tpu.memory_space<vmem>>, vector<8x32xf32>,
    %c0_12 = arith.constant 0 : index
    %c0_13 = arith.constant 0 : index
    %15 = vector.load %arg6[%c0_12, %c0_13] : memref<8x32xf32, #tpu.memory_space<vmem>>, vector<8x32xf32>
    %16 = arith.mulf %7, %7 : vector<256x32xf32>
    %cst_14 = arith.constant dense<0.000000e+00> : vector<32xf32>
    %17 = vector.multi_reduction <add>, %16, %cst_14 [0] : vector<256x32xf32> to vector<32xf32>
    %18 = vector.shape_cast %17 : vector<32xf32> to vector<1x32xf32>
    %19 = vector.broadcast %18 : vector<1x32xf32> to vector<8x32xf32>
    %20 = arith.addf %15, %19 : vector<8x32xf32>
    %c0_15 = arith.constant 0 : index
    %c0_16 = arith.constant 0 : index
    %21 = vector.load %arg6[%c0_15, %c0_16] : memref<8x32xf32, #tpu.memory_space<vmem>>, vector<8x32xf32>
    tpu.vector_store %arg6[%c0_15, %c0_16], %20 {strides = array<i32>} : memref<8x32xf32, #tpu.memory_space<vmem>>, vector<8x32xf32>,
    return
  }
  func.func @transform_0(%arg0: i32, %arg1: i32) -> (i32, i32) {
    %c1_i32 = arith.constant 1 : i32
    %0 = arith.muli %arg0, %c1_i32 : i32
    %1 = arith.addi %0, %arg1 : i32
    %c0_i32 = arith.constant 0 : i32
    %c0_i32_0 = arith.constant 0 : i32
    return %1, %c0_i32 : i32, i32
  }
  func.func @transform_1(%arg0: i32, %arg1: i32) -> (i32, i32) {
    %c0_i32 = arith.constant 0 : i32
    %c0_i32_0 = arith.constant 0 : i32
    %c0_i32_1 = arith.constant 0 : i32
    return %c0_i32, %c0_i32_0 : i32, i32
  }
  func.func @transform_2(%arg0: i32, %arg1: i32) -> (i32, i32) {
    %c1_i32 = arith.constant 1 : i32
    %0 = arith.muli %arg0, %c1_i32 : i32
    %1 = arith.addi %0, %arg1 : i32
    %c0_i32 = arith.constant 0 : i32
    %c0_i32_0 = arith.constant 0 : i32
    return %1, %c0_i32 : i32, i32
  }
  func.func @transform_3(%arg0: i32, %arg1: i32) -> (i32, i32) {
    %c0_i32 = arith.constant 0 : i32
    %c0_i32_0 = arith.constant 0 : i32
    return %arg0, %c0_i32 : i32, i32
  }
  func.func @transform_4(%arg0: i32, %arg1: i32) -> (i32, i32) {
    %c0_i32 = arith.constant 0 : i32
    %c0_i32_0 = arith.constant 0 : i32
    return %arg0, %c0_i32 : i32, i32
  }
}

module attributes {stable_mosaic.version = 11 : i64} {
  func.func @_bn_kernel(%arg0: i32, %arg1: memref<64x128xf32, #tpu.memory_space<vmem>>, %arg2: memref<1x128xf32, #tpu.memory_space<vmem>>, %arg3: memref<1x128xf32, #tpu.memory_space<vmem>>, %arg4: memref<64x128xf32, #tpu.memory_space<vmem>>) attributes {dimension_semantics = [#tpu.dimension_semantics<parallel>], iteration_bounds = array<i64: 2>, scalar_prefetch = 0 : i64, scratch_operands = 0 : i64, tpu.core_type = #tpu.core_type<tc>, window_params = [{transform_indices = @transform_0, window_bounds = array<i64: 64, 128>}, {pipeline_mode = #tpu.pipeline_mode<synchronous>, transform_indices = @transform_1, window_bounds = array<i64: 1, 128>}, {pipeline_mode = #tpu.pipeline_mode<synchronous>, transform_indices = @transform_2, window_bounds = array<i64: 1, 128>}, {transform_indices = @transform_3, window_bounds = array<i64: 64, 128>}]} {
    %c0 = arith.constant 0 : index
    %c0_0 = arith.constant 0 : index
    %0 = vector.load %arg1[%c0, %c0_0] : memref<64x128xf32, #tpu.memory_space<vmem>>, vector<64x128xf32>
    %c0_1 = arith.constant 0 : index
    %c0_2 = arith.constant 0 : index
    %1 = vector.load %arg2[%c0_1, %c0_2] : memref<1x128xf32, #tpu.memory_space<vmem>>, vector<1x128xf32>
    %2 = vector.broadcast %1 : vector<1x128xf32> to vector<64x128xf32>
    %3 = arith.mulf %0, %2 : vector<64x128xf32>
    %c0_3 = arith.constant 0 : index
    %c0_4 = arith.constant 0 : index
    %4 = vector.load %arg3[%c0_3, %c0_4] : memref<1x128xf32, #tpu.memory_space<vmem>>, vector<1x128xf32>
    %5 = vector.broadcast %4 : vector<1x128xf32> to vector<64x128xf32>
    %6 = arith.addf %3, %5 : vector<64x128xf32>
    %c0_5 = arith.constant 0 : index
    %c0_6 = arith.constant 0 : index
    %7 = vector.load %arg4[%c0_5, %c0_6] : memref<64x128xf32, #tpu.memory_space<vmem>>, vector<64x128xf32>
    tpu.vector_store %arg4[%c0_5, %c0_6], %6 {strides = array<i32>} : memref<64x128xf32, #tpu.memory_space<vmem>>, vector<64x128xf32>,
    return
  }
  func.func @transform_0(%arg0: i32) -> (i32, i32) {
    %c0_i32 = arith.constant 0 : i32
    %c0_i32_0 = arith.constant 0 : i32
    return %arg0, %c0_i32 : i32, i32
  }
  func.func @transform_1(%arg0: i32) -> (i32, i32) {
    %c0_i32 = arith.constant 0 : i32
    %c0_i32_0 = arith.constant 0 : i32
    %c0_i32_1 = arith.constant 0 : i32
    return %c0_i32, %c0_i32_0 : i32, i32
  }
  func.func @transform_2(%arg0: i32) -> (i32, i32) {
    %c0_i32 = arith.constant 0 : i32
    %c0_i32_0 = arith.constant 0 : i32
    %c0_i32_1 = arith.constant 0 : i32
    return %c0_i32, %c0_i32_0 : i32, i32
  }
  func.func @transform_3(%arg0: i32) -> (i32, i32) {
    %c0_i32 = arith.constant 0 : i32
    %c0_i32_0 = arith.constant 0 : i32
    return %arg0, %c0_i32 : i32, i32
  }
}

</mosaic_0001>

<llo_original>
// kernel: tile.18
$region0: #{tile.18}
  #allocation0 [shape = 's32[1]{0}', space=sflag, size = 0x4, scoped, tag = 'scoped memory for tile.18']
  %s0 = inlined_call_operand.vmem [shape: f32[8], index: 0, kind: input, shape index: {}]
  %s1 = inlined_call_operand.vmem [shape: f32[16,8], index: 1, kind: output, shape index: {}]
  // Predicated region
  $region2: #{tile.18} parent=0 // pred_check
    _
  $region3: #{tile.18} parent=0 // pred_check_branch
    %3 = sbr.rel (0) target = $region5
  $region4: #{tile.18} parent=0 // pred_region
    _
  $region5: #{tile.18} parent=0 // pred_fallthru
    _
  %v4 = vld [vmem:[%s0] ss:$0 sm:$0xff]
  %5 = vst [vmem:[%s1] sm:$0xff] %v4
  %s6 = scalar_lea.vmem %s1, 8
  %7 = vst [vmem:[%s6] sm:$0xff] %v4

// kernel: tile.19
$region0: #{tile.19}
  %s0 = inlined_call_operand.vmem [shape: f32[16,8], index: 0, kind: input, shape index: {}]
  %s1 = inlined_call_operand.vmem [shape: f32[1,128], index: 1, kind: output, shape index: {}]
  $region1: #{tile.19} parent=0
    #allocation0 [shape = 'u8[4096]{0}', space=vmem, size = 0x1000, scoped, tag = 'scoped mem for output reshape']
    %v2 = vld [vmem:[%s0] sm:$0x1]
    %vm3 = vcmask 64512
    %4 = vst.msk [vmem:[#allocation0] sm:$0x1] %vm3, %v2
    %s5 = scalar_lea.vmem %s0, 15
    %v6 = vld [vmem:[%s5] sm:$0x1]
    %7 = vrot.lane.b32.xlu0 %v6, 120
    %v8 = vpop.permute.xlu0 %7
    %vm9 = vcmask 1048512
    %10 = vst.msk [vmem:[#allocation0] sm:$0x1] %vm9, %v8
    %s11 = scalar_lea.vmem %s0, 14
    %v12 = vld [vmem:[%s11] sm:$0x1]
    %13 = vrot.lane.b32.xlu0 %v12, 112
    %v14 = vpop.permute.xlu0 %13
    %vm15 = vcmask 982912
    %16 = vst.msk [vmem:[#allocation0] sm:$0x1] %vm15, %v14
    %s17 = scalar_lea.vmem %s0, 13
    %v18 = vld [vmem:[%s17] sm:$0x1]
    %19 = vrot.lane.b32.xlu0 %v18, 104
    %v20 = vpop.permute.xlu0 %19
    %vm21 = vcmask 917312
    %22 = vst.msk [vmem:[#allocation0] sm:$0x1] %vm21, %v20
    %s23 = scalar_lea.vmem %s0, 12
    %v24 = vld [vmem:[%s23] sm:$0x1]
    %25 = vrot.lane.b32.xlu0 %v24, 96
    %v26 = vpop.permute.xlu0 %25
    %vm27 = vcmask 851712
    %28 = vst.msk [vmem:[#allocation0] sm:$0x1] %vm27, %v26
    %s29 = scalar_lea.vmem %s0, 11
    %v30 = vld [vmem:[%s29] sm:$0x1]
    %31 = vrot.lane.b32.xlu0 %v30, 88
    %v32 = vpop.permute.xlu0 %31
    %vm33 = vcmask 786112
    %34 = vst.msk [vmem:[#allocation0] sm:$0x1] %vm33, %v32
    %s35 = scalar_lea.vmem %s0, 10
    %v36 = vld [vmem:[%s35] sm:$0x1]
    %37 = vrot.lane.b32.xlu0 %v36, 80
    %v38 = vpop.permute.xlu0 %37
    %vm39 = vcmask 720512
    %40 = vst.msk [vmem:[#allocation0] sm:$0x1] %vm39, %v38
    %s41 = scalar_lea.vmem %s0, 9
    %v42 = vld [vmem:[%s41] sm:$0x1]
    %43 = vrot.lane.b32.xlu0 %v42, 72
    %v44 = vpop.permute.xlu0 %43
    %vm45 = vcmask 654912
    %46 = vst.msk [vmem:[#allocation0] sm:$0x1] %vm45, %v44
    %s47 = scalar_lea.vmem %s0, 8
    %v48 = vld [vmem:[%s47] sm:$0x1]
    %49 = vrot.lane.b32.xlu0 %v48, 64
    %v50 = vpop.permute.xlu0 %49
    %vm51 = vcmask 589312
    %52 = vst.msk [vmem:[#allocation0] sm:$0x1] %vm51, %v50
    %s53 = scalar_lea.vmem %s0, 7
    %v54 = vld [vmem:[%s53] sm:$0x1]
    %55 = vrot.lane.b32.xlu0 %v54, 56
    %v56 = vpop.permute.xlu0 %55
    %vm57 = vcmask 523712
    %58 = vst.msk [vmem:[#allocation0] sm:$0x1] %vm57, %v56
    %s59 = scalar_lea.vmem %s0, 6
    %v60 = vld [vmem:[%s59] sm:$0x1]
    %61 = vrot.lane.b32.xlu0 %v60, 48
    %v62 = vpop.permute.xlu0 %61
    %vm63 = vcmask 458112
    %64 = vst.msk [vmem:[#allocation0] sm:$0x1] %vm63, %v62
    %s65 = scalar_lea.vmem %s0, 5
    %v66 = vld [vmem:[%s65] sm:$0x1]
    %67 = vrot.lane.b32.xlu0 %v66, 40
    %v68 = vpop.permute.xlu0 %67
    %vm69 = vcmask 392512
    %70 = vst.msk [vmem:[#allocation0] sm:$0x1] %vm69, %v68
    %s71 = scalar_lea.vmem %s0, 4
    %v72 = vld [vmem:[%s71] sm:$0x1]
    %73 = vrot.lane.b32.xlu0 %v72, 32
    %v74 = vpop.permute.xlu0 %73
    %vm75 = vcmask 326912
    %76 = vst.msk [vmem:[#allocation0] sm:$0x1] %vm75, %v74
    %s77 = scalar_lea.vmem %s0, 3
    %v78 = vld [vmem:[%s77] sm:$0x1]
    %79 = vrot.lane.b32.xlu0 %v78, 24
    %v80 = vpop.permute.xlu0 %79
    %vm81 = vcmask 261312
    %82 = vst.msk [vmem:[#allocation0] sm:$0x1] %vm81, %v80
    %s83 = scalar_lea.vmem %s0, 2
    %v84 = vld [vmem:[%s83] sm:$0x1]
    %85 = vrot.lane.b32.xlu0 %v84, 16
    %v86 = vpop.permute.xlu0 %85
    %vm87 = vcmask 195712
    %88 = vst.msk [vmem:[#allocation0] sm:$0x1] %vm87, %v86
    %s89 = scalar_lea.vmem %s0, 1
    %v90 = vld [vmem:[%s89] sm:$0x1]
    %91 = vrot.lane.b32.xlu0 %v90, 8
    %v92 = vpop.permute.xlu0 %91
    %vm93 = vcmask 130112
    %94 = vst.msk [vmem:[#allocation0] sm:$0x1] %vm93, %v92
    %s96 = sshllo.u32 0, 1
    %v98 = vld [vmem:[#allocation0] sm:%s96]
    %s99 = sshllo.u32 0, 1
    %100 = vst [vmem:[%s1] sm:%s99] %v98

// kernel: decoder_block_forward.3
$region0: #{decoder_block_forward.3}
  #allocation0 [shape = 'u32[]', space=smem, size = 0x4, offset = 0x4, fixed_abs, tag = 'smem constant byte address 0x4 - core index']
  #allocation1 [shape = 'u32[144,128]{1,0:T(1,128)}', space=vmem, size = 0x12000, scoped, tag = 'internal scratch']
  %s0 = inlined_call_operand.vmem [shape: f32[128,128], index: 0, kind: input, shape index: {}, may-alias: {0,3}]
  %s1 = inlined_call_operand.vmem [shape: f32[1,128], index: 1, kind: input, shape index: {}]
  %s2 = inlined_call_operand.vmem [shape: f32[1,128], index: 2, kind: input, shape index: {}]
  %s3 = inlined_call_operand.vmem [shape: f32[128,128], index: 3, kind: output, shape index: {}, may-alias: {0,3}]
  %s4 = sld [smem:[#allocation0]]
  $region45: #{decoder_block_forward.3} parent=0
    _
  %s6 = ssub.s32 1, %s4
  %s7 = scalar_select 0, %s6, %s4
  loop: start=0, step=1, limit=4
  $region2: #{decoder_block_forward.3} parent=0 // loop_pre_header
    _
  $region3: #{decoder_block_forward.3} parent=0 // loop_header
    %s9 = sphi 0, %s13
    %p10 = scmp.ge.s32.totalorder %s9, 4
    %s19 = sphi 0, %s21
    %s22 = sphi 0, %s19
    %s23 = sphi 0, %s22
    %s39 = sphi 0, %s23
    %s43 = sphi 0, %s43
    %s45 = sphi 0, %s43
    %s46 = sphi 0, %s45
    %s60 = sphi 0, %s46
    %s64 = sphi 0, %s64
    %s66 = sphi 0, %s64
    %s67 = sphi 0, %s66
    %s81 = sphi 0, %s67
    %s87 = sphi 0, %s89
    %s90 = sphi 0, %s87
    %s91 = sphi 0, %s90
    %s107 = sphi 0, %s91
  $region4: #{decoder_block_forward.3} parent=0 // loop_header_branch
    %12 = sbr.rel (%p10) target = $region8
  $region5: #{decoder_block_forward.3} parent=0 // loop_body
    %s14 = ssub.s32 %s9, 1
    %s15 = ssub.s32 %s9, 2
    %s16 = sadd.s32 %s9, 1
    %s17 = ssub.s32 %s9, %s16
    %p18 = scmp.eq.s32.totalorder %s17, 0
    %s20 = sadd.s32 %s19, 1
    %s21 = scalar_select %p18, %s19, %s20
    %p24 = pneg %p18
    %p25 = scmp.eq.s32.totalorder %s9, 1
    %p26 = por %p24, %p25
    %p27 = scmp.ne.s32.totalorder %s19, %s22
    %p28 = scmp.eq.s32.totalorder %s9, 0
    %p29 = por %p27, %p28
    %p30 = scmp.ne.s32.totalorder %s19, %s22
    %p31 = scmp.eq.s32.totalorder %s14, 1
    %p32 = por %p30, %p31
    %p33 = scmp.ne.s32.totalorder %s22, %s23
    %p34 = scmp.eq.s32.totalorder %s14, 0
    %p35 = por %p33, %p34
    %p36 = scmp.ne.s32.totalorder %s22, %s23
    %p37 = scmp.eq.s32.totalorder %s15, 1
    %p38 = por %p36, %p37
    %p40 = scmp.ne.s32.totalorder %s23, %s39
    %p41 = scmp.eq.s32.totalorder %s15, 0
    %p42 = por %p40, %p41
    %s44 = sadd.s32 %s43, 1
    %p47 = scmp.eq.s32.totalorder %s9, 1
    %p48 = scmp.ne.s32.totalorder %s43, %s45
    %p49 = scmp.eq.s32.totalorder %s9, 0
    %p50 = por %p48, %p49
    %p51 = scmp.ne.s32.totalorder %s43, %s45
    %p52 = scmp.eq.s32.totalorder %s14, 1
    %p53 = por %p51, %p52
    %p54 = scmp.ne.s32.totalorder %s45, %s46
    %p55 = scmp.eq.s32.totalorder %s14, 0
    %p56 = por %p54, %p55
    %p57 = scmp.ne.s32.totalorder %s45, %s46
    %p58 = scmp.eq.s32.totalorder %s15, 1
    %p59 = por %p57, %p58
    %p61 = scmp.ne.s32.totalorder %s46, %s60
    %p62 = scmp.eq.s32.totalorder %s15, 0
    %p63 = por %p61, %p62
    %s65 = sadd.s32 %s64, 1
    %p68 = scmp.eq.s32.totalorder %s9, 1
    %p69 = scmp.ne.s32.totalorder %s64, %s66
    %p70 = scmp.eq.s32.totalorder %s9, 0
    %p71 = por %p69, %p70
    %p72 = scmp.ne.s32.totalorder %s64, %s66
    %p73 = scmp.eq.s32.totalorder %s14, 1
    %p74 = por %p72, %p73
    %p75 = scmp.ne.s32.totalorder %s66, %s67
    %p76 = scmp.eq.s32.totalorder %s14, 0
    %p77 = por %p75, %p76
    %p78 = scmp.ne.s32.totalorder %s66, %s67
    %p79 = scmp.eq.s32.totalorder %s15, 1
    %p80 = por %p78, %p79
    %p82 = scmp.ne.s32.totalorder %s67, %s81
    %p83 = scmp.eq.s32.totalorder %s15, 0
    %p84 = por %p82, %p83
    %s85 = ssub.s32 %s9, %s16
    %p86 = scmp.eq.s32.totalorder %s85, 0
    %s88 = sadd.s32 %s87, 1
    %s89 = scalar_select %p86, %s87, %s88
    %p92 = pneg %p86
    %p93 = scmp.eq.s32.totalorder %s9, 1
    %p94 = por %p92, %p93
    %p95 = scmp.ne.s32.totalorder %s87, %s90
    %p96 = scmp.eq.s32.totalorder %s9, 0
    %p97 = por %p95, %p96
    %p98 = scmp.ne.s32.totalorder %s87, %s90
    %p99 = scmp.eq.s32.totalorder %s14, 1
    %p100 = por %p98, %p99
    %p101 = scmp.ne.s32.totalorder %s90, %s91
    %p102 = scmp.eq.s32.totalorder %s14, 0
    %p103 = por %p101, %p102
    %p104 = scmp.ne.s32.totalorder %s90, %s91
    %p105 = scmp.eq.s32.totalorder %s15, 1
    %p106 = por %p104, %p105
    %p108 = scmp.ne.s32.totalorder %s91, %s107
    %p109 = scmp.eq.s32.totalorder %s15, 0
    %p110 = por %p108, %p109
    %p111 = scmp.le.s32.totalorder 1, %s9
    %p112 = scmp.lt.s32.totalorder %s9, 3
    %p113 = pnand %p111, %p112
    %p114 = pneg %p113
    // Predicated region
    $region9: #{decoder_block_forward.3} parent=5 // pred_check
      _
    $region10: #{decoder_block_forward.3} parent=5 // pred_check_branch
      %116 = sbr.rel (%p113) target = $region12
    $region11: #{decoder_block_forward.3} parent=5 // pred_region
      %s117 = ssub.s32 %s9, 1
      // Predicated region
      $region13: #{decoder_block_forward.3} parent=11 // pred_check
        %p118 = pneg %p56
      $region14: #{decoder_block_forward.3} parent=11 // pred_check_branch
        %120 = sbr.rel (%p118) target = $region16
      $region15: #{decoder_block_forward.3} parent=11 // pred_region
        _
      $region16: #{decoder_block_forward.3} parent=11 // pred_fallthru
        _
      // Predicated region
      $region17: #{decoder_block_forward.3} parent=11 // pred_check
        %p121 = pneg %p77
      $region18: #{decoder_block_forward.3} parent=11 // pred_check_branch
        %123 = sbr.rel (%p121) target = $region20
      $region19: #{decoder_block_forward.3} parent=11 // pred_region
        _
      $region20: #{decoder_block_forward.3} parent=11 // pred_fallthru
        _
    $region12: #{decoder_block_forward.3} parent=5 // pred_fallthru
      _
    %p124 = scmp.lt.s32.totalorder %s9, 2
    // Predicated region
    $region21: #{decoder_block_forward.3} parent=5 // pred_check
      %p125 = pneg %p124
    $region22: #{decoder_block_forward.3} parent=5 // pred_check_branch
      %127 = sbr.rel (%p125) target = $region24
    $region23: #{decoder_block_forward.3} parent=5 // pred_region
      // Predicated region
      $region25: #{decoder_block_forward.3} parent=23 // pred_check
        %p128 = pneg %p29
      $region26: #{decoder_block_forward.3} parent=23 // pred_check_branch
        %130 = sbr.rel (%p128) target = $region28
      $region27: #{decoder_block_forward.3} parent=23 // pred_region
        %s131 = smul.u32 8, %s9
        %p132 = scmp.lt.s32.totalorder %s131, 15
        %s133 = scalar_select %p132, %s131, 15
        %s134 = smul.addr %s133, 8
        %s135 = scalar_lea.vmem %s0, %s134
        %s136 = smul.u32 8, %s9
      $region28: #{decoder_block_forward.3} parent=23 // pred_fallthru
        _
    $region24: #{decoder_block_forward.3} parent=5 // pred_fallthru
      _
    %p137 = scmp.le.s32.totalorder 1, %s9
    %p138 = scmp.lt.s32.totalorder %s9, 3
    %p139 = pnand %p137, %p138
    %p140 = pneg %p139
    // Predicated region
    $region29: #{decoder_block_forward.3} parent=5 // pred_check
      _
    $region30: #{decoder_block_forward.3} parent=5 // pred_check_branch
      %142 = sbr.rel (%p139) target = $region32
    $region31: #{decoder_block_forward.3} parent=5 // pred_region
      %s143 = ssub.s32 %s9, 1
      %s144 = smul.u32 8, %s14
      %p145 = scmp.lt.s32.totalorder %s144, 15
      %s146 = scalar_select %p145, %s144, 15
      %s147 = smul.addr %s146, 8
      %s148 = scalar_lea.vmem %s0, %s147
      %p149 = pneg %p35
      %p150 = pneg %p32
      %p151 = pneg %p56
      %p152 = pneg %p53
      %p153 = pneg %p77
      %p154 = pneg %p74
      %p155 = pneg %p103
      %p156 = pneg %p100
      %s157 = smul.u32 8, %s14
      %p158 = scmp.lt.s32.totalorder %s157, 15
      %s159 = scalar_select %p158, %s157, 15
      %s160 = smul.addr %s159, 8
      %s161 = scalar_lea.vmem %s3, %s160
      %s162 = smul.u32 8, %s14
      %p163 = scmp.lt.s32.totalorder %s162, 15
      %s164 = scalar_select %p163, %s162, 15
      %s165 = smul.addr %s164, 8
      %s166 = scalar_lea.vmem %s0, %s165
      %s167 = smul.u32 8, %s14
      %s168 = smul.u32 8, %s14
      %p169 = scmp.lt.s32.totalorder %s168, 15
      %s170 = scalar_select %p169, %s168, 15
      %s171 = smul.addr %s170, 8
      %s172 = scalar_lea.vmem %s3, %s171
      %s173 = smul.u32 8, %s14
      %v174 = vld [vmem:[%s166] sm:$0xff]
      %v175 = vld [vmem:[%s166 + $0x8] sm:$0xff]
      %v176 = vld [vmem:[%s166 + $0x10] sm:$0xff]
      %v177 = vld [vmem:[%s166 + $0x18] sm:$0xff]
      %v178 = vld [vmem:[%s166 + $0x20] sm:$0xff]
      %v179 = vld [vmem:[%s166 + $0x28] sm:$0xff]
      %v180 = vld [vmem:[%s166 + $0x30] sm:$0xff]
      %v181 = vld [vmem:[%s166 + $0x38] sm:$0xff]
      %v182 = vld [vmem:[%s1] sm:$0x1]
      %v184 = vlaneseq
      %v185 = vshrl.u32 %v184, 7
      %v186 = vsub.s32 0, %v185
      %v187 = vrot.slane %v182, %v186
      %v189 = vmul.f32 %v174, %v187
      %v190 = vmul.f32 %v175, %v187
      %v191 = vmul.f32 %v176, %v187
      %v192 = vmul.f32 %v177, %v187
      %v193 = vmul.f32 %v178, %v187
      %v194 = vmul.f32 %v179, %v187
      %v195 = vmul.f32 %v180, %v187
      %v196 = vmul.f32 %v181, %v187
      %v197 = vld [vmem:[%s2] sm:$0x1]
      %v199 = vlaneseq
      %v200 = vshrl.u32 %v199, 7
      %v201 = vsub.s32 0, %v200
      %v202 = vrot.slane %v197, %v201
      %v204 = vadd.f32 %v189, %v202
      %v205 = vadd.f32 %v190, %v202
      %v206 = vadd.f32 %v191, %v202
      %v207 = vadd.f32 %v192, %v202
      %v208 = vadd.f32 %v193, %v202
      %v209 = vadd.f32 %v194, %v202
      %v210 = vadd.f32 %v195, %v202
      %v211 = vadd.f32 %v196, %v202
      %212 = vst [vmem:[%s172] sm:$0xff] %v204
      %213 = vst [vmem:[%s172 + $0x8] sm:$0xff] %v205
      %214 = vst [vmem:[%s172 + $0x10] sm:$0xff] %v206
      %215 = vst [vmem:[%s172 + $0x18] sm:$0xff] %v207
      %216 = vst [vmem:[%s172 + $0x20] sm:$0xff] %v208
      %217 = vst [vmem:[%s172 + $0x28] sm:$0xff] %v209
      %218 = vst [vmem:[%s172 + $0x30] sm:$0xff] %v210
      %219 = vst [vmem:[%s172 + $0x38] sm:$0xff] %v211
      %s220 = smul.u32 8, %s14
      %p221 = scmp.lt.s32.totalorder %s220, 15
      %s222 = scalar_select %p221, %s220, 15
      %s223 = smul.addr %s222, 8
      %s224 = scalar_lea.vmem %s3, %s223
      // Predicated region
      $region33: #{decoder_block_forward.3} parent=31 // pred_check
        %p225 = pneg %p100
      $region34: #{decoder_block_forward.3} parent=31 // pred_check_branch
        %227 = sbr.rel (%p225) target = $region36
      $region35: #{decoder_block_forward.3} parent=31 // pred_region
        %s228 = smul.u32 8, %s14
      $region36: #{decoder_block_forward.3} parent=31 // pred_fallthru
        _
    $region32: #{decoder_block_forward.3} parent=5 // pred_fallthru
      _
    %p229 = scmp.le.s32.totalorder 2, %s9
    // Predicated region
    $region37: #{decoder_block_forward.3} parent=5 // pred_check
      %p230 = pneg %p229
    $region38: #{decoder_block_forward.3} parent=5 // pred_check_branch
      %232 = sbr.rel (%p230) target = $region40
    $region39: #{decoder_block_forward.3} parent=5 // pred_region
      %s233 = ssub.s32 %s9, 2
      // Predicated region
      $region41: #{decoder_block_forward.3} parent=39 // pred_check
        %p234 = pneg %p106
      $region42: #{decoder_block_forward.3} parent=39 // pred_check_branch
        %236 = sbr.rel (%p234) target = $region44
      $region43: #{decoder_block_forward.3} parent=39 // pred_region
        %s237 = smul.u32 8, %s15
        %p238 = scmp.lt.s32.totalorder %s237, 15
        %s239 = scalar_select %p238, %s237, 15
        %s240 = smul.addr %s239, 8
        %s241 = scalar_lea.vmem %s3, %s240
      $region44: #{decoder_block_forward.3} parent=39 // pred_fallthru
        _
    $region40: #{decoder_block_forward.3} parent=5 // pred_fallthru
      _
  $region6: #{decoder_block_forward.3} parent=0 // loop_footer
    %s13 = sadd.s32 1, %s9
  $region7: #{decoder_block_forward.3} parent=0 // loop_footer_branch
    %8 = sbr.rel target = $region3
  $region8: #{decoder_block_forward.3} parent=0 // loop_exit
    _

// kernel: decoder_block_forward.2
$region0: #{decoder_block_forward.2}
  #allocation0 [shape = 'u32[]', space=smem, size = 0x4, offset = 0x4, fixed_abs, tag = 'smem constant byte address 0x4 - core index']
  #allocation1 [shape = 'u32[144,128]{1,0:T(1,128)}', space=vmem, size = 0x12000, scoped, tag = 'internal scratch']
  %s0 = inlined_call_operand.vmem [shape: f32[512,36], index: 0, kind: input, shape index: {}]
  %s1 = inlined_call_operand.vmem [shape: f32[36,32], index: 1, kind: input, shape index: {}]
  %s2 = inlined_call_operand.vmem [shape: f32[512,32], index: 2, kind: output, shape index: {0}]
  %s3 = inlined_call_operand.vmem [shape: f32[16,32], index: 3, kind: output, shape index: {1}]
  %s4 = inlined_call_operand.vmem [shape: f32[16,32], index: 4, kind: output, shape index: {2}]
  %5 = xla_tuple %s2, %s3, %s4
  %s6 = sld [smem:[#allocation0]]
  $region61: #{decoder_block_forward.2} parent=0
    _
  %s8 = ssub.s32 1, %s6
  %s9 = scalar_select 0, %s8, %s6
  loop: start=0, step=1, limit=4
  $region2: #{decoder_block_forward.2} parent=0 // loop_pre_header
    _
  $region3: #{decoder_block_forward.2} parent=0 // loop_header
    %s11 = sphi 0, %s15
    %p12 = scmp.ge.s32.totalorder %s11, 4
    %s18 = sphi 0, %s30
    %s19 = sphi 0, %s26
    %s20 = sphi 0, %s18
    %s21 = sphi 0, %s19
    %s22 = sphi 0, %s20
    %s23 = sphi 0, %s21
    %s35 = sphi 0, %s37
    %s38 = sphi 0, %s35
    %s39 = sphi 0, %s38
    %s55 = sphi 0, %s39
    %s59 = sphi 0, %s59
    %s61 = sphi 0, %s59
    %s62 = sphi 0, %s61
    %s76 = sphi 0, %s62
    %s84 = sphi 0, %s86
    %s87 = sphi 0, %s84
    %s88 = sphi 0, %s87
    %s104 = sphi 0, %s88
    %s110 = sphi 0, %s112
    %s113 = sphi 0, %s110
    %s114 = sphi 0, %s113
    %s130 = sphi 0, %s114
    %s136 = sphi 0, %s138
    %s139 = sphi 0, %s136
    %s140 = sphi 0, %s139
    %s156 = sphi 0, %s140
  $region4: #{decoder_block_forward.2} parent=0 // loop_header_branch
    %14 = sbr.rel (%p12) target = $region8
  $region5: #{decoder_block_forward.2} parent=0 // loop_body
    %s16 = ssub.s32 %s11, 1
    %s17 = ssub.s32 %s11, 2
    %s24 = sadd.s32 1, %s19
    %p25 = scmp.ge.s32.totalorder %s24, 1
    %s26 = scalar_select %p25, 0, %s24
    %s27 = sadd.s32 1, %s18
    %s28 = scalar_select %p25, %s27, %s18
    %p29 = scmp.ge.s32.totalorder %s28, 2
    %s30 = scalar_select %p29, 0, %s28
    %s31 = sadd.s32 %s18, %s19
    %s32 = sadd.s32 %s30, %s26
    %s33 = ssub.s32 %s31, %s32
    %p34 = scmp.eq.s32.totalorder %s33, 0
    %s36 = sadd.s32 %s35, 1
    %s37 = scalar_select %p34, %s35, %s36
    %p40 = pneg %p34
    %p41 = scmp.eq.s32.totalorder %s11, 1
    %p42 = por %p40, %p41
    %p43 = scmp.ne.s32.totalorder %s35, %s38
    %p44 = scmp.eq.s32.totalorder %s11, 0
    %p45 = por %p43, %p44
    %p46 = scmp.ne.s32.totalorder %s35, %s38
    %p47 = scmp.eq.s32.totalorder %s16, 1
    %p48 = por %p46, %p47
    %p49 = scmp.ne.s32.totalorder %s38, %s39
    %p50 = scmp.eq.s32.totalorder %s16, 0
    %p51 = por %p49, %p50
    %p52 = scmp.ne.s32.totalorder %s38, %s39
    %p53 = scmp.eq.s32.totalorder %s17, 1
    %p54 = por %p52, %p53
    %p56 = scmp.ne.s32.totalorder %s39, %s55
    %p57 = scmp.eq.s32.totalorder %s17, 0
    %p58 = por %p56, %p57
    %s60 = sadd.s32 %s59, 1
    %p63 = scmp.eq.s32.totalorder %s11, 1
    %p64 = scmp.ne.s32.totalorder %s59, %s61
    %p65 = scmp.eq.s32.totalorder %s11, 0
    %p66 = por %p64, %p65
    %p67 = scmp.ne.s32.totalorder %s59, %s61
    %p68 = scmp.eq.s32.totalorder %s16, 1
    %p69 = por %p67, %p68
    %p70 = scmp.ne.s32.totalorder %s61, %s62
    %p71 = scmp.eq.s32.totalorder %s16, 0
    %p72 = por %p70, %p71
    %p73 = scmp.ne.s32.totalorder %s61, %s62
    %p74 = scmp.eq.s32.totalorder %s17, 1
    %p75 = por %p73, %p74
    %p77 = scmp.ne.s32.totalorder %s62, %s76
    %p78 = scmp.eq.s32.totalorder %s17, 0
    %p79 = por %p77, %p78
    %s80 = sadd.s32 %s18, %s19
    %s81 = sadd.s32 %s30, %s26
    %s82 = ssub.s32 %s80, %s81
    %p83 = scmp.eq.s32.totalorder %s82, 0
    %s85 = sadd.s32 %s84, 1
    %s86 = scalar_select %p83, %s84, %s85
    %p89 = pneg %p83
    %p90 = scmp.eq.s32.totalorder %s11, 1
    %p91 = por %p89, %p90
    %p92 = scmp.ne.s32.totalorder %s84, %s87
    %p93 = scmp.eq.s32.totalorder %s11, 0
    %p94 = por %p92, %p93
    %p95 = scmp.ne.s32.totalorder %s84, %s87
    %p96 = scmp.eq.s32.totalorder %s16, 1
    %p97 = por %p95, %p96
    %p98 = scmp.ne.s32.totalorder %s87, %s88
    %p99 = scmp.eq.s32.totalorder %s16, 0
    %p100 = por %p98, %p99
    %p101 = scmp.ne.s32.totalorder %s87, %s88
    %p102 = scmp.eq.s32.totalorder %s17, 1
    %p103 = por %p101, %p102
    %p105 = scmp.ne.s32.totalorder %s88, %s104
    %p106 = scmp.eq.s32.totalorder %s17, 0
    %p107 = por %p105, %p106
    %s108 = ssub.s32 %s18, %s30
    %p109 = scmp.eq.s32.totalorder %s108, 0
    %s111 = sadd.s32 %s110, 1
    %s112 = scalar_select %p109, %s110, %s111
    %p115 = pneg %p109
    %p116 = scmp.eq.s32.totalorder %s11, 1
    %p117 = por %p115, %p116
    %p118 = scmp.ne.s32.totalorder %s110, %s113
    %p119 = scmp.eq.s32.totalorder %s11, 0
    %p120 = por %p118, %p119
    %p121 = scmp.ne.s32.totalorder %s110, %s113
    %p122 = scmp.eq.s32.totalorder %s16, 1
    %p123 = por %p121, %p122
    %p124 = scmp.ne.s32.totalorder %s113, %s114
    %p125 = scmp.eq.s32.totalorder %s16, 0
    %p126 = por %p124, %p125
    %p127 = scmp.ne.s32.totalorder %s113, %s114
    %p128 = scmp.eq.s32.totalorder %s17, 1
    %p129 = por %p127, %p128
    %p131 = scmp.ne.s32.totalorder %s114, %s130
    %p132 = scmp.eq.s32.totalorder %s17, 0
    %p133 = por %p131, %p132
    %s134 = ssub.s32 %s18, %s30
    %p135 = scmp.eq.s32.totalorder %s134, 0
    %s137 = sadd.s32 %s136, 1
    %s138 = scalar_select %p135, %s136, %s137
    %p141 = pneg %p135
    %p142 = scmp.eq.s32.totalorder %s11, 1
    %p143 = por %p141, %p142
    %p144 = scmp.ne.s32.totalorder %s136, %s139
    %p145 = scmp.eq.s32.totalorder %s11, 0
    %p146 = por %p144, %p145
    %p147 = scmp.ne.s32.totalorder %s136, %s139
    %p148 = scmp.eq.s32.totalorder %s16, 1
    %p149 = por %p147, %p148
    %p150 = scmp.ne.s32.totalorder %s139, %s140
    %p151 = scmp.eq.s32.totalorder %s16, 0
    %p152 = por %p150, %p151
    %p153 = scmp.ne.s32.totalorder %s139, %s140
    %p154 = scmp.eq.s32.totalorder %s17, 1
    %p155 = por %p153, %p154
    %p157 = scmp.ne.s32.totalorder %s140, %s156
    %p158 = scmp.eq.s32.totalorder %s17, 0
    %p159 = por %p157, %p158
    %p160 = scmp.le.s32.totalorder 1, %s11
    %p161 = scmp.lt.s32.totalorder %s11, 3
    %p162 = pnand %p160, %p161
    %p163 = pneg %p162
    // Predicated region
    $region9: #{decoder_block_forward.2} parent=5 // pred_check
      _
    $region10: #{decoder_block_forward.2} parent=5 // pred_check_branch
      %165 = sbr.rel (%p162) target = $region12
    $region11: #{decoder_block_forward.2} parent=5 // pred_region
      %s166 = ssub.s32 %s11, 1
      // Predicated region
      $region13: #{decoder_block_forward.2} parent=11 // pred_check
        %p167 = pneg %p72
      $region14: #{decoder_block_forward.2} parent=11 // pred_check_branch
        %169 = sbr.rel (%p167) target = $region16
      $region15: #{decoder_block_forward.2} parent=11 // pred_region
        _
      $region16: #{decoder_block_forward.2} parent=11 // pred_fallthru
        _
    $region12: #{decoder_block_forward.2} parent=5 // pred_fallthru
      _
    %p170 = scmp.lt.s32.totalorder %s11, 2
    // Predicated region
    $region17: #{decoder_block_forward.2} parent=5 // pred_check
      %p171 = pneg %p170
    $region18: #{decoder_block_forward.2} parent=5 // pred_check_branch
      %173 = sbr.rel (%p171) target = $region20
    $region19: #{decoder_block_forward.2} parent=5 // pred_region
      // Predicated region
      $region21: #{decoder_block_forward.2} parent=19 // pred_check
        %p174 = pneg %p45
      $region22: #{decoder_block_forward.2} parent=19 // pred_check_branch
        %176 = sbr.rel (%p174) target = $region24
      $region23: #{decoder_block_forward.2} parent=19 // pred_region
        %s177 = sadd.s32 %s18, %s19
        %s178 = smul.u32 32, %s177
        %p179 = scmp.lt.s32.totalorder %s178, 63
        %s180 = scalar_select %p179, %s178, 63
        %s181 = smul.addr %s180, 8
        %s182 = scalar_lea.vmem %s0, %s181
        %s183 = sadd.s32 %s18, %s19
        %s184 = smul.u32 32, %s183
      $region24: #{decoder_block_forward.2} parent=19 // pred_fallthru
        _
    $region20: #{decoder_block_forward.2} parent=5 // pred_fallthru
      _
    %p185 = scmp.le.s32.totalorder 1, %s11
    %p186 = scmp.lt.s32.totalorder %s11, 3
    %p187 = pnand %p185, %p186
    %p188 = pneg %p187
    // Predicated region
    $region25: #{decoder_block_forward.2} parent=5 // pred_check
      _
    $region26: #{decoder_block_forward.2} parent=5 // pred_check_branch
      %190 = sbr.rel (%p187) target = $region28
    $region27: #{decoder_block_forward.2} parent=5 // pred_region
      %s191 = ssub.s32 %s11, 1
      %s192 = sadd.s32 %s20, %s21
      %s193 = smul.u32 32, %s192
      %p194 = scmp.lt.s32.totalorder %s193, 63
      %s195 = scalar_select %p194, %s193, 63
      %s196 = smul.addr %s195, 8
      %s197 = scalar_lea.vmem %s0, %s196
      %p198 = pneg %p51
      %p199 = pneg %p48
      %p200 = pneg %p72
      %p201 = pneg %p69
      %p202 = pneg %p100
      %p203 = pneg %p97
      %s204 = sadd.s32 %s20, %s21
      %s205 = smul.u32 32, %s204
      %p206 = scmp.lt.s32.totalorder %s205, 63
      %s207 = scalar_select %p206, %s205, 63
      %s208 = smul.addr %s207, 8
      %s209 = scalar_lea.vmem %s2, %s208
      %p210 = pneg %p126
      %p211 = pneg %p123
      %p212 = scmp.lt.s32.totalorder %s20, 1
      %s213 = scalar_select %p212, %s20, 1
      %s214 = smul.addr %s213, 8
      %s215 = scalar_lea.vmem %s3, %s214
      %p216 = pneg %p152
      %p217 = pneg %p149
      %p218 = scmp.lt.s32.totalorder %s20, 1
      %s219 = scalar_select %p218, %s20, 1
      %s220 = smul.addr %s219, 8
      %s221 = scalar_lea.vmem %s4, %s220
      %s222 = sadd.s32 %s20, %s21
      %s223 = smul.u32 32, %s222
      %p224 = scmp.lt.s32.totalorder %s223, 63
      %s225 = scalar_select %p224, %s223, 63
      %s226 = smul.addr %s225, 8
      %s227 = scalar_lea.vmem %s0, %s226
      %s228 = sadd.s32 %s20, %s21
      %s229 = smul.u32 32, %s228
      %s230 = sadd.s32 %s20, %s21
      %s231 = smul.u32 32, %s230
      %p232 = scmp.lt.s32.totalorder %s231, 63
      %s233 = scalar_select %p232, %s231, 63
      %s234 = smul.addr %s233, 8
      %s235 = scalar_lea.vmem %s2, %s234
      %s236 = sadd.s32 %s20, %s21
      %s237 = smul.u32 32, %s236
      %p238 = scmp.lt.s32.totalorder %s20, 1
      %s239 = scalar_select %p238, %s20, 1
      %s240 = smul.addr %s239, 8
      %s241 = scalar_lea.vmem %s3, %s240
      %p242 = scmp.lt.s32.totalorder %s20, 1
      %s243 = scalar_select %p242, %s20, 1
      %s244 = smul.addr %s243, 8
      %s245 = scalar_lea.vmem %s4, %s244
      %p246 = scmp.eq.s32.totalorder %s21, 0
      // Predicated region
      $region29: #{decoder_block_forward.2} parent=27 // pred_check
        %p247 = pneg %p246
      $region30: #{decoder_block_forward.2} parent=27 // pred_check_branch
        %249 = sbr.rel (%p247) target = $region32
      $region31: #{decoder_block_forward.2} parent=27 // pred_region
        %vm250 = vcmask 261120
        %251 = vst.msk [vmem:[%s241] sm:$0xff] %vm250, 0.0
        %252 = vst.msk [vmem:[%s245] sm:$0xff] %vm250, 0.0
      $region32: #{decoder_block_forward.2} parent=27 // pred_fallthru
        _
      %v253 = vld [vmem:[%s227] sm:$0xff]
      %v254 = vld [vmem:[%s227 + $0x8] sm:$0xff]
      %v255 = vld [vmem:[%s227 + $0x10] sm:$0xff]
      %v256 = vld [vmem:[%s227 + $0x18] sm:$0xff]
      %v257 = vld [vmem:[%s227 + $0x20] sm:$0xff]
      %v258 = vld [vmem:[%s227 + $0x28] sm:$0xff]
      %v259 = vld [vmem:[%s227 + $0x30] sm:$0xff]
      %v260 = vld [vmem:[%s227 + $0x38] sm:$0xff]
      %v261 = vld [vmem:[%s227 + $0x40] sm:$0xff]
      %v262 = vld [vmem:[%s227 + $0x48] sm:$0xff]
      %v263 = vld [vmem:[%s227 + $0x50] sm:$0xff]
      %v264 = vld [vmem:[%s227 + $0x58] sm:$0xff]
      %v265 = vld [vmem:[%s227 + $0x60] sm:$0xff]
      %v266 = vld [vmem:[%s227 + $0x68] sm:$0xff]
      %v267 = vld [vmem:[%s227 + $0x70] sm:$0xff]
      %v268 = vld [vmem:[%s227 + $0x78] sm:$0xff]
      %v269 = vld [vmem:[%s227 + $0x80] sm:$0xff]
      %v270 = vld [vmem:[%s227 + $0x88] sm:$0xff]
      %v271 = vld [vmem:[%s227 + $0x90] sm:$0xff]
      %v272 = vld [vmem:[%s227 + $0x98] sm:$0xff]
      %v273 = vld [vmem:[%s227 + $0xa0] sm:$0xff]
      %v274 = vld [vmem:[%s227 + $0xa8] sm:$0xff]
      %v275 = vld [vmem:[%s227 + $0xb0] sm:$0xff]
      %v276 = vld [vmem:[%s227 + $0xb8] sm:$0xff]
      %v277 = vld [vmem:[%s227 + $0xc0] sm:$0xff]
      %v278 = vld [vmem:[%s227 + $0xc8] sm:$0xff]
      %v279 = vld [vmem:[%s227 + $0xd0] sm:$0xff]
      %v280 = vld [vmem:[%s227 + $0xd8] sm:$0xff]
      %v281 = vld [vmem:[%s227 + $0xe0] sm:$0xff]
      %v282 = vld [vmem:[%s227 + $0xe8] sm:$0xff]
      %v283 = vld [vmem:[%s227 + $0xf0] sm:$0xff]
      %v284 = vld [vmem:[%s227 + $0xf8] sm:$0xff]
      %v285 = vmax.f32 %v253, 0.0
      %v286 = vmax.f32 %v254, 0.0
      %v287 = vmax.f32 %v255, 0.0
      %v288 = vmax.f32 %v256, 0.0
      %v289 = vmax.f32 %v257, 0.0
      %v290 = vmax.f32 %v258, 0.0
      %v291 = vmax.f32 %v259, 0.0
      %v292 = vmax.f32 %v260, 0.0
      %v293 = vmax.f32 %v261, 0.0
      %v294 = vmax.f32 %v262, 0.0
      %v295 = vmax.f32 %v263, 0.0
      %v296 = vmax.f32 %v264, 0.0
      %v297 = vmax.f32 %v265, 0.0
      %v298 = vmax.f32 %v266, 0.0
      %v299 = vmax.f32 %v267, 0.0
      %v300 = vmax.f32 %v268, 0.0
      %v301 = vmax.f32 %v269, 0.0
      %v302 = vmax.f32 %v270, 0.0
      %v303 = vmax.f32 %v271, 0.0
      %v304 = vmax.f32 %v272, 0.0
      %v305 = vmax.f32 %v273, 0.0
      %v306 = vmax.f32 %v274, 0.0
      %v307 = vmax.f32 %v275, 0.0
      %v308 = vmax.f32 %v276, 0.0
      %v309 = vmax.f32 %v277, 0.0
      %v310 = vmax.f32 %v278, 0.0
      %v311 = vmax.f32 %v279, 0.0
      %v312 = vmax.f32 %v280, 0.0
      %v313 = vmax.f32 %v281, 0.0
      %v314 = vmax.f32 %v282, 0.0
      %v315 = vmax.f32 %v283, 0.0
      %v316 = vmax.f32 %v284, 0.0
      %v317 = vld [vmem:[%s1] sm:$0xff]
      %v318 = vld [vmem:[%s1 + $0x8] sm:$0xff]
      %v319 = vld [vmem:[%s1 + $0x10] sm:$0xff]
      %v320 = vld [vmem:[%s1 + $0x18] sm:$0xff]
      %v321 = vld [vmem:[%s1 + $0x20] sm:$0xf]
      %vm322 = vcmask 293888
      %v324 = vsel %vm322, %v285, 0
      %v327 = vsel %vm322, %v286, 0
      %v330 = vsel %vm322, %v287, 0
      %v333 = vsel %vm322, %v288, 0
      %v336 = vsel %vm322, %v289, 0
      %v339 = vsel %vm322, %v290, 0
      %v342 = vsel %vm322, %v291, 0
      %v345 = vsel %vm322, %v292, 0
      %v348 = vsel %vm322, %v293, 0
      %v351 = vsel %vm322, %v294, 0
      %v354 = vsel %vm322, %v295, 0
      %v357 = vsel %vm322, %v296, 0
      %v360 = vsel %vm322, %v297, 0
      %v363 = vsel %vm322, %v298, 0
      %v366 = vsel %vm322, %v299, 0
      %v369 = vsel %vm322, %v300, 0
      %v372 = vsel %vm322, %v301, 0
      %v375 = vsel %vm322, %v302, 0
      %v378 = vsel %vm322, %v303, 0
      %v381 = vsel %vm322, %v304, 0
      %v384 = vsel %vm322, %v305, 0
      %v387 = vsel %vm322, %v306, 0
      %v390 = vsel %vm322, %v307, 0
      %v393 = vsel %vm322, %v308, 0
      %v396 = vsel %vm322, %v309, 0
      %v399 = vsel %vm322, %v310, 0
      %v402 = vsel %vm322, %v311, 0
      %v405 = vsel %vm322, %v312, 0
      %v408 = vsel %vm322, %v313, 0
      %v411 = vsel %vm322, %v314, 0
      %v414 = vsel %vm322, %v315, 0
      %v417 = vsel %vm322, %v316, 0
      %vm419 = vcmask 1043456
      %v421 = vsel %vm419, %v321, 0
      %423 = vmatprep.subr.mxu0 0.0
      %424 = vmatpush1.msra.mxu0 %v317
      %425 = vmatprep.subr.mxu0 0.0
      %426 = vmatpush1.msra.mxu0 %v318
      %427 = vmatprep.subr.mxu0 0.0
      %428 = vmatpush1.msra.mxu0 %v319
      %429 = vmatprep.subr.mxu0 0.0
      %430 = vmatpush1.msra.mxu0 %v320
      %431 = vmatprep.subr.mxu0 0.0
      %432 = vmatpush1.msra.mxu0 %v421
      %433 = vmatprep.subr.mxu0 0.0
      %434 = vmatpush1.msra.mxu0 0.0
      %435 = vmatprep.subr.mxu0 0.0
      %436 = vmatpush1.msra.mxu0 0.0
      %437 = vmatprep.subr.mxu0 0.0
      %438 = vmatpush1.msra.mxu0 0.0
      %439 = vmatprep.subr.mxu0 0.0
      %440 = vmatpush1.msra.mxu0 0.0
      %441 = vmatprep.subr.mxu0 0.0
      %442 = vmatpush1.msra.mxu0 0.0
      %443 = vmatprep.subr.mxu0 0.0
      %444 = vmatpush1.msra.mxu0 0.0
      %445 = vmatprep.subr.mxu0 0.0
      %446 = vmatpush1.msra.mxu0 0.0
      %447 = vmatprep.subr.mxu0 0.0
      %448 = vmatpush1.msra.mxu0 0.0
      %449 = vmatprep.subr.mxu0 0.0
      %450 = vmatpush1.msra.mxu0 0.0
      %451 = vmatprep.subr.mxu0 0.0
      %452 = vmatpush1.msra.mxu0 0.0
      %453 = vmatprep.subr.mxu0 0.0
      %454 = vmatpush1.msra.mxu0 0.0
      %455 = vmatprep.subr.mxu0 0.0
      %456 = vmatpush1.msra.mxu0 0.0
      %457 = vmatprep.subr.mxu0 0.0
      %458 = vmatpush1.msra.mxu0 0.0
      %459 = vmatprep.subr.mxu0 0.0
      %460 = vmatpush1.msra.mxu0 0.0
      %461 = vmatprep.subr.mxu0 0.0
      %462 = vmatpush1.msra.mxu0 0.0
      %463 = vmatprep.subr.mxu0 0.0
      %464 = vmatpush1.msra.mxu0 0.0
      %465 = vmatprep.subr.mxu0 0.0
      %466 = vmatpush1.msra.mxu0 0.0
      %467 = vmatprep.subr.mxu0 0.0
      %468 = vmatpush1.msra.mxu0 0.0
      %469 = vmatprep.subr.mxu0 0.0
      %470 = vmatpush1.msra.mxu0 0.0
      %471 = vmatprep.subr.mxu0 0.0
      %472 = vmatpush1.msra.mxu0 0.0
      %473 = vmatprep.subr.mxu0 0.0
      %474 = vmatpush1.msra.mxu0 0.0
      %475 = vmatprep.subr.mxu0 0.0
      %476 = vmatpush1.msra.mxu0 0.0
      %477 = vmatprep.subr.mxu0 0.0
      %478 = vmatpush1.msra.mxu0 0.0
      %479 = vmatprep.subr.mxu0 0.0
      %480 = vmatpush1.msra.mxu0 0.0
      %481 = vmatprep.subr.mxu0 0.0
      %482 = vmatpush1.msra.mxu0 0.0
      %483 = vmatprep.subr.mxu0 0.0
      %484 = vmatpush1.msra.mxu0 0.0
      %485 = vmatprep.subr.mxu0 0.0
      %486 = vmatpush1.msra.mxu0 0.0
      %487 = vmatprep.mubr.f32.mxu0 0.0
      %488 = vmatmul.mubr.f32.gmra.mrb[0].mxu0 %v324
      %v489 = vpop.f32.mrb[0].mxu0
      %v490 = vadd.f32 0.0, %v489
      %v491 = vpop.f32.mrb[0].mxu0
      %492 = vmatprep.mubr.f32.mxu0 0.0
      %493 = vmatmul.mubr.f32.gmra.mrb[0].mxu0 %v327
      %v494 = vpop.f32.mrb[0].mxu0
      %v495 = vadd.f32 0.0, %v494
      %v496 = vpop.f32.mrb[0].mxu0
      %497 = vmatprep.mubr.f32.mxu0 0.0
      %498 = vmatmul.mubr.f32.gmra.mrb[0].mxu0 %v330
      %v499 = vpop.f32.mrb[0].mxu0
      %v500 = vadd.f32 0.0, %v499
      %v501 = vpop.f32.mrb[0].mxu0
      %502 = vmatprep.mubr.f32.mxu0 0.0
      %503 = vmatmul.mubr.f32.gmra.mrb[0].mxu0 %v333
      %v504 = vpop.f32.mrb[0].mxu0
      %v505 = vadd.f32 0.0, %v504
      %v506 = vpop.f32.mrb[0].mxu0
      %507 = vmatprep.mubr.f32.mxu0 0.0
      %508 = vmatmul.mubr.f32.gmra.mrb[0].mxu0 %v336
      %v509 = vpop.f32.mrb[0].mxu0
      %v510 = vadd.f32 0.0, %v509
      %v511 = vpop.f32.mrb[0].mxu0
      %512 = vmatprep.mubr.f32.mxu0 0.0
      %513 = vmatmul.mubr.f32.gmra.mrb[0].mxu0 %v339
      %v514 = vpop.f32.mrb[0].mxu0
      %v515 = vadd.f32 0.0, %v514
      %v516 = vpop.f32.mrb[0].mxu0
      %517 = vmatprep.mubr.f32.mxu0 0.0
      %518 = vmatmul.mubr.f32.gmra.mrb[0].mxu0 %v342
      %v519 = vpop.f32.mrb[0].mxu0
      %v520 = vadd.f32 0.0, %v519
      %v521 = vpop.f32.mrb[0].mxu0
      %522 = vmatprep.mubr.f32.mxu0 0.0
      %523 = vmatmul.mubr.f32.gmra.mrb[0].mxu0 %v345
      %v524 = vpop.f32.mrb[0].mxu0
      %v525 = vadd.f32 0.0, %v524
      %v526 = vpop.f32.mrb[0].mxu0
      %527 = vmatprep.mubr.f32.mxu0 0.0
      %528 = vmatmul.mubr.f32.gmra.mrb[0].mxu0 %v348
      %v529 = vpop.f32.mrb[0].mxu0
      %v530 = vadd.f32 0.0, %v529
      %v531 = vpop.f32.mrb[0].mxu0
      %532 = vmatprep.mubr.f32.mxu0 0.0
      %533 = vmatmul.mubr.f32.gmra.mrb[0].mxu0 %v351
      %v534 = vpop.f32.mrb[0].mxu0
      %v535 = vadd.f32 0.0, %v534
      %v536 = vpop.f32.mrb[0].mxu0
      %537 = vmatprep.mubr.f32.mxu0 0.0
      %538 = vmatmul.mubr.f32.gmra.mrb[0].mxu0 %v354
      %v539 = vpop.f32.mrb[0].mxu0
      %v540 = vadd.f32 0.0, %v539
      %v541 = vpop.f32.mrb[0].mxu0
      %542 = vmatprep.mubr.f32.mxu0 0.0
      %543 = vmatmul.mubr.f32.gmra.mrb[0].mxu0 %v357
      %v544 = vpop.f32.mrb[0].mxu0
      %v545 = vadd.f32 0.0, %v544
      %v546 = vpop.f32.mrb[0].mxu0
      %547 = vmatprep.mubr.f32.mxu0 0.0
      %548 = vmatmul.mubr.f32.gmra.mrb[0].mxu0 %v360
      %v549 = vpop.f32.mrb[0].mxu0
      %v550 = vadd.f32 0.0, %v549
      %v551 = vpop.f32.mrb[0].mxu0
      %552 = vmatprep.mubr.f32.mxu0 0.0
      %553 = vmatmul.mubr.f32.gmra.mrb[0].mxu0 %v363
      %v554 = vpop.f32.mrb[0].mxu0
      %v555 = vadd.f32 0.0, %v554
      %v556 = vpop.f32.mrb[0].mxu0
      %557 = vmatprep.mubr.f32.mxu0 0.0
      %558 = vmatmul.mubr.f32.gmra.mrb[0].mxu0 %v366
      %v559 = vpop.f32.mrb[0].mxu0
      %v560 = vadd.f32 0.0, %v559
      %v561 = vpop.f32.mrb[0].mxu0
      %562 = vmatprep.mubr.f32.mxu0 0.0
      %563 = vmatmul.mubr.f32.gmra.mrb[0].mxu0 %v369
      %v564 = vpop.f32.mrb[0].mxu0
      %v565 = vadd.f32 0.0, %v564
      %v566 = vpop.f32.mrb[0].mxu0
      %567 = vmatprep.mubr.f32.mxu0 0.0
      %568 = vmatmul.mubr.f32.gmra.mrb[0].mxu0 %v372
      %v569 = vpop.f32.mrb[0].mxu0
      %v570 = vadd.f32 0.0, %v569
      %v571 = vpop.f32.mrb[0].mxu0
      %572 = vmatprep.mubr.f32.mxu0 0.0
      %573 = vmatmul.mubr.f32.gmra.mrb[0].mxu0 %v375
      %v574 = vpop.f32.mrb[0].mxu0
      %v575 = vadd.f32 0.0, %v574
      %v576 = vpop.f32.mrb[0].mxu0
      %577 = vmatprep.mubr.f32.mxu0 0.0
      %578 = vmatmul.mubr.f32.gmra.mrb[0].mxu0 %v378
      %v579 = vpop.f32.mrb[0].mxu0
      %v580 = vadd.f32 0.0, %v579
      %v581 = vpop.f32.mrb[0].mxu0
      %582 = vmatprep.mubr.f32.mxu0 0.0
      %583 = vmatmul.mubr.f32.gmra.mrb[0].mxu0 %v381
      %v584 = vpop.f32.mrb[0].mxu0
      %v585 = vadd.f32 0.0, %v584
      %v586 = vpop.f32.mrb[0].mxu0
      %587 = vmatprep.mubr.f32.mxu0 0.0
      %588 = vmatmul.mubr.f32.gmra.mrb[0].mxu0 %v384
      %v589 = vpop.f32.mrb[0].mxu0
      %v590 = vadd.f32 0.0, %v589
      %v591 = vpop.f32.mrb[0].mxu0
      %592 = vmatprep.mubr.f32.mxu0 0.0
      %593 = vmatmul.mubr.f32.gmra.mrb[0].mxu0 %v387
      %v594 = vpop.f32.mrb[0].mxu0
      %v595 = vadd.f32 0.0, %v594
      %v596 = vpop.f32.mrb[0].mxu0
      %597 = vmatprep.mubr.f32.mxu0 0.0
      %598 = vmatmul.mubr.f32.gmra.mrb[0].mxu0 %v390
      %v599 = vpop.f32.mrb[0].mxu0
      %v600 = vadd.f32 0.0, %v599
      %v601 = vpop.f32.mrb[0].mxu0
      %602 = vmatprep.mubr.f32.mxu0 0.0
      %603 = vmatmul.mubr.f32.gmra.mrb[0].mxu0 %v393
      %v604 = vpop.f32.mrb[0].mxu0
      %v605 = vadd.f32 0.0, %v604
      %v606 = vpop.f32.mrb[0].mxu0
      %607 = vmatprep.mubr.f32.mxu0 0.0
      %608 = vmatmul.mubr.f32.gmra.mrb[0].mxu0 %v396
      %v609 = vpop.f32.mrb[0].mxu0
      %v610 = vadd.f32 0.0, %v609
      %v611 = vpop.f32.mrb[0].mxu0
      %612 = vmatprep.mubr.f32.mxu0 0.0
      %613 = vmatmul.mubr.f32.gmra.mrb[0].mxu0 %v399
      %v614 = vpop.f32.mrb[0].mxu0
      %v615 = vadd.f32 0.0, %v614
      %v616 = vpop.f32.mrb[0].mxu0
      %617 = vmatprep.mubr.f32.mxu0 0.0
      %618 = vmatmul.mubr.f32.gmra.mrb[0].mxu0 %v402
      %v619 = vpop.f32.mrb[0].mxu0
      %v620 = vadd.f32 0.0, %v619
      %v621 = vpop.f32.mrb[0].mxu0
      %622 = vmatprep.mubr.f32.mxu0 0.0
      %623 = vmatmul.mubr.f32.gmra.mrb[0].mxu0 %v405
      %v624 = vpop.f32.mrb[0].mxu0
      %v625 = vadd.f32 0.0, %v624
      %v626 = vpop.f32.mrb[0].mxu0
      %627 = vmatprep.mubr.f32.mxu0 0.0
      %628 = vmatmul.mubr.f32.gmra.mrb[0].mxu0 %v408
      %v629 = vpop.f32.mrb[0].mxu0
      %v630 = vadd.f32 0.0, %v629
      %v631 = vpop.f32.mrb[0].mxu0
      %632 = vmatprep.mubr.f32.mxu0 0.0
      %633 = vmatmul.mubr.f32.gmra.mrb[0].mxu0 %v411
      %v634 = vpop.f32.mrb[0].mxu0
      %v635 = vadd.f32 0.0, %v634
      %v636 = vpop.f32.mrb[0].mxu0
      %637 = vmatprep.mubr.f32.mxu0 0.0
      %638 = vmatmul.mubr.f32.gmra.mrb[0].mxu0 %v414
      %v639 = vpop.f32.mrb[0].mxu0
      %v640 = vadd.f32 0.0, %v639
      %v641 = vpop.f32.mrb[0].mxu0
      %642 = vmatprep.mubr.f32.mxu0 0.0
      %643 = vmatmul.mubr.f32.gmra.mrb[0].mxu0 %v417
      %v644 = vpop.f32.mrb[0].mxu0
      %v645 = vadd.f32 0.0, %v644
      %v646 = vpop.f32.mrb[0].mxu0
      %647 = vdwg.mxu0
      %vm648 = vcmask 261120
      %649 = vst.msk [vmem:[%s235] sm:$0xff] %vm648, %v490
      %650 = vst.msk [vmem:[%s235 + $0x8] sm:$0xff] %vm648, %v495
      %651 = vst.msk [vmem:[%s235 + $0x10] sm:$0xff] %vm648, %v500
      %652 = vst.msk [vmem:[%s235 + $0x18] sm:$0xff] %vm648, %v505
      %653 = vst.msk [vmem:[%s235 + $0x20] sm:$0xff] %vm648, %v510
      %654 = vst.msk [vmem:[%s235 + $0x28] sm:$0xff] %vm648, %v515
      %655 = vst.msk [vmem:[%s235 + $0x30] sm:$0xff] %vm648, %v520
      %656 = vst.msk [vmem:[%s235 + $0x38] sm:$0xff] %vm648, %v525
      %657 = vst.msk [vmem:[%s235 + $0x40] sm:$0xff] %vm648, %v530
      %658 = vst.msk [vmem:[%s235 + $0x48] sm:$0xff] %vm648, %v535
      %659 = vst.msk [vmem:[%s235 + $0x50] sm:$0xff] %vm648, %v540
      %660 = vst.msk [vmem:[%s235 + $0x58] sm:$0xff] %vm648, %v545
      %661 = vst.msk [vmem:[%s235 + $0x60] sm:$0xff] %vm648, %v550
      %662 = vst.msk [vmem:[%s235 + $0x68] sm:$0xff] %vm648, %v555
      %663 = vst.msk [vmem:[%s235 + $0x70] sm:$0xff] %vm648, %v560
      %664 = vst.msk [vmem:[%s235 + $0x78] sm:$0xff] %vm648, %v565
      %665 = vst.msk [vmem:[%s235 + $0x80] sm:$0xff] %vm648, %v570
      %666 = vst.msk [vmem:[%s235 + $0x88] sm:$0xff] %vm648, %v575
      %667 = vst.msk [vmem:[%s235 + $0x90] sm:$0xff] %vm648, %v580
      %668 = vst.msk [vmem:[%s235 + $0x98] sm:$0xff] %vm648, %v585
      %669 = vst.msk [vmem:[%s235 + $0xa0] sm:$0xff] %vm648, %v590
      %670 = vst.msk [vmem:[%s235 + $0xa8] sm:$0xff] %vm648, %v595
      %671 = vst.msk [vmem:[%s235 + $0xb0] sm:$0xff] %vm648, %v600
      %672 = vst.msk [vmem:[%s235 + $0xb8] sm:$0xff] %vm648, %v605
      %673 = vst.msk [vmem:[%s235 + $0xc0] sm:$0xff] %vm648, %v610
      %674 = vst.msk [vmem:[%s235 + $0xc8] sm:$0xff] %vm648, %v615
      %675 = vst.msk [vmem:[%s235 + $0xd0] sm:$0xff] %vm648, %v620
      %676 = vst.msk [vmem:[%s235 + $0xd8] sm:$0xff] %vm648, %v625
      %677 = vst.msk [vmem:[%s235 + $0xe0] sm:$0xff] %vm648, %v630
      %678 = vst.msk [vmem:[%s235 + $0xe8] sm:$0xff] %vm648, %v635
      %679 = vst.msk [vmem:[%s235 + $0xf0] sm:$0xff] %vm648, %v640
      %680 = vst.msk [vmem:[%s235 + $0xf8] sm:$0xff] %vm648, %v645
      %v681 = vld [vmem:[%s241] sm:$0xff]
      %v682 = vsel %vm648, %v490, 0.0
      %v683 = vsel %vm648, %v495, 0.0
      %v684 = vadd.f32 %v682, %v683
      %v685 = vsel %vm648, %v500, 0.0
      %v686 = vadd.f32 %v684, %v685
      %v687 = vsel %vm648, %v505, 0.0
      %v688 = vadd.f32 %v686, %v687
      %v689 = vsel %vm648, %v510, 0.0
      %v690 = vadd.f32 %v688, %v689
      %v691 = vsel %vm648, %v515, 0.0
      %v692 = vadd.f32 %v690, %v691
      %v693 = vsel %vm648, %v520, 0.0
      %v694 = vadd.f32 %v692, %v693
      %v695 = vsel %vm648, %v525, 0.0
      %v696 = vadd.f32 %v694, %v695
      %v697 = vsel %vm648, %v530, 0.0
      %v698 = vadd.f32 %v696, %v697
      %v699 = vsel %vm648, %v535, 0.0
      %v700 = vadd.f32 %v698, %v699
      %v701 = vsel %vm648, %v540, 0.0
      %v702 = vadd.f32 %v700, %v701
      %v703 = vsel %vm648, %v545, 0.0
      %v704 = vadd.f32 %v702, %v703
      %v705 = vsel %vm648, %v550, 0.0
      %v706 = vadd.f32 %v704, %v705
      %v707 = vsel %vm648, %v555, 0.0
      %v708 = vadd.f32 %v706, %v707
      %v709 = vsel %vm648, %v560, 0.0
      %v710 = vadd.f32 %v708, %v709
      %v711 = vsel %vm648, %v565, 0.0
      %v712 = vadd.f32 %v710, %v711
      %v713 = vsel %vm648, %v570, 0.0
      %v714 = vadd.f32 %v712, %v713
      %v715 = vsel %vm648, %v575, 0.0
      %v716 = vadd.f32 %v714, %v715
      %v717 = vsel %vm648, %v580, 0.0
      %v718 = vadd.f32 %v716, %v717
      %v719 = vsel %vm648, %v585, 0.0
      %v720 = vadd.f32 %v718, %v719
      %v721 = vsel %vm648, %v590, 0.0
      %v722 = vadd.f32 %v720, %v721
      %v723 = vsel %vm648, %v595, 0.0
      %v724 = vadd.f32 %v722, %v723
      %v725 = vsel %vm648, %v600, 0.0
      %v726 = vadd.f32 %v724, %v725
      %v727 = vsel %vm648, %v605, 0.0
      %v728 = vadd.f32 %v726, %v727
      %v729 = vsel %vm648, %v610, 0.0
      %v730 = vadd.f32 %v728, %v729
      %v731 = vsel %vm648, %v615, 0.0
      %v732 = vadd.f32 %v730, %v731
      %v733 = vsel %vm648, %v620, 0.0
      %v734 = vadd.f32 %v732, %v733
      %v735 = vsel %vm648, %v625, 0.0
      %v736 = vadd.f32 %v734, %v735
      %v737 = vsel %vm648, %v630, 0.0
      %v738 = vadd.f32 %v736, %v737
      %v739 = vsel %vm648, %v635, 0.0
      %v740 = vadd.f32 %v738, %v739
      %v741 = vsel %vm648, %v640, 0.0
      %v742 = vadd.f32 %v740, %v741
      %v743 = vsel %vm648, %v645, 0.0
      %v744 = vadd.f32 %v742, %v743
      %v745 = vrot.slane %v744, 4
      %v746 = vadd.f32 %v744, %v745
      %v747 = vrot.slane %v746, 2
      %v748 = vadd.f32 %v746, %v747
      %v749 = vrot.slane %v748, 1
      %v750 = vadd.f32 %v748, %v749
      %v751 = vadd.f32 %v681, %v750
      %752 = vst.msk [vmem:[%s241] sm:$0xff] %vm648, %v751
      %v753 = vld [vmem:[%s245] sm:$0xff]
      %v754 = vmul.f32 %v490, %v490
      %v755 = vmul.f32 %v495, %v495
      %v756 = vmul.f32 %v500, %v500
      %v757 = vmul.f32 %v505, %v505
      %v758 = vmul.f32 %v510, %v510
      %v759 = vmul.f32 %v515, %v515
      %v760 = vmul.f32 %v520, %v520
      %v761 = vmul.f32 %v525, %v525
      %v762 = vmul.f32 %v530, %v530
      %v763 = vmul.f32 %v535, %v535
      %v764 = vmul.f32 %v540, %v540
      %v765 = vmul.f32 %v545, %v545
      %v766 = vmul.f32 %v550, %v550
      %v767 = vmul.f32 %v555, %v555
      %v768 = vmul.f32 %v560, %v560
      %v769 = vmul.f32 %v565, %v565
      %v770 = vmul.f32 %v570, %v570
      %v771 = vmul.f32 %v575, %v575
      %v772 = vmul.f32 %v580, %v580
      %v773 = vmul.f32 %v585, %v585
      %v774 = vmul.f32 %v590, %v590
      %v775 = vmul.f32 %v595, %v595
      %v776 = vmul.f32 %v600, %v600
      %v777 = vmul.f32 %v605, %v605
      %v778 = vmul.f32 %v610, %v610
      %v779 = vmul.f32 %v615, %v615
      %v780 = vmul.f32 %v620, %v620
      %v781 = vmul.f32 %v625, %v625
      %v782 = vmul.f32 %v630, %v630
      %v783 = vmul.f32 %v635, %v635
      %v784 = vmul.f32 %v640, %v640
      %v785 = vmul.f32 %v645, %v645
      %v786 = vsel %vm648, %v754, 0.0
      %v787 = vsel %vm648, %v755, 0.0
      %v788 = vadd.f32 %v786, %v787
      %v789 = vsel %vm648, %v756, 0.0
      %v790 = vadd.f32 %v788, %v789
      %v791 = vsel %vm648, %v757, 0.0
      %v792 = vadd.f32 %v790, %v791
      %v793 = vsel %vm648, %v758, 0.0
      %v794 = vadd.f32 %v792, %v793
      %v795 = vsel %vm648, %v759, 0.0
      %v796 = vadd.f32 %v794, %v795
      %v797 = vsel %vm648, %v760, 0.0
      %v798 = vadd.f32 %v796, %v797
      %v799 = vsel %vm648, %v761, 0.0
      %v800 = vadd.f32 %v798, %v799
      %v801 = vsel %vm648, %v762, 0.0
      %v802 = vadd.f32 %v800, %v801
      %v803 = vsel %vm648, %v763, 0.0
      %v804 = vadd.f32 %v802, %v803
      %v805 = vsel %vm648, %v764, 0.0
      %v806 = vadd.f32 %v804, %v805
      %v807 = vsel %vm648, %v765, 0.0
      %v808 = vadd.f32 %v806, %v807
      %v809 = vsel %vm648, %v766, 0.0
      %v810 = vadd.f32 %v808, %v809
      %v811 = vsel %vm648, %v767, 0.0
      %v812 = vadd.f32 %v810, %v811
      %v813 = vsel %vm648, %v768, 0.0
      %v814 = vadd.f32 %v812, %v813
      %v815 = vsel %vm648, %v769, 0.0
      %v816 = vadd.f32 %v814, %v815
      %v817 = vsel %vm648, %v770, 0.0
      %v818 = vadd.f32 %v816, %v817
      %v819 = vsel %vm648, %v771, 0.0
      %v820 = vadd.f32 %v818, %v819
      %v821 = vsel %vm648, %v772, 0.0
      %v822 = vadd.f32 %v820, %v821
      %v823 = vsel %vm648, %v773, 0.0
      %v824 = vadd.f32 %v822, %v823
      %v825 = vsel %vm648, %v774, 0.0
      %v826 = vadd.f32 %v824, %v825
      %v827 = vsel %vm648, %v775, 0.0
      %v828 = vadd.f32 %v826, %v827
      %v829 = vsel %vm648, %v776, 0.0
      %v830 = vadd.f32 %v828, %v829
      %v831 = vsel %vm648, %v777, 0.0
      %v832 = vadd.f32 %v830, %v831
      %v833 = vsel %vm648, %v778, 0.0
      %v834 = vadd.f32 %v832, %v833
      %v835 = vsel %vm648, %v779, 0.0
      %v836 = vadd.f32 %v834, %v835
      %v837 = vsel %vm648, %v780, 0.0
      %v838 = vadd.f32 %v836, %v837
      %v839 = vsel %vm648, %v781, 0.0
      %v840 = vadd.f32 %v838, %v839
      %v841 = vsel %vm648, %v782, 0.0
      %v842 = vadd.f32 %v840, %v841
      %v843 = vsel %vm648, %v783, 0.0
      %v844 = vadd.f32 %v842, %v843
      %v845 = vsel %vm648, %v784, 0.0
      %v846 = vadd.f32 %v844, %v845
      %v847 = vsel %vm648, %v785, 0.0
      %v848 = vadd.f32 %v846, %v847
      %v849 = vrot.slane %v848, 4
      %v850 = vadd.f32 %v848, %v849
      %v851 = vrot.slane %v850, 2
      %v852 = vadd.f32 %v850, %v851
      %v853 = vrot.slane %v852, 1
      %v854 = vadd.f32 %v852, %v853
      %v855 = vadd.f32 %v753, %v854
      %856 = vst.msk [vmem:[%s245] sm:$0xff] %vm648, %v855
      %s857 = sadd.s32 %s20, %s21
      %s858 = smul.u32 32, %s857
      %p859 = scmp.lt.s32.totalorder %s858, 63
      %s860 = scalar_select %p859, %s858, 63
      %s861 = smul.addr %s860, 8
      %s862 = scalar_lea.vmem %s2, %s861
      %p863 = scmp.lt.s32.totalorder %s20, 1
      %s864 = scalar_select %p863, %s20, 1
      %s865 = smul.addr %s864, 8
      %s866 = scalar_lea.vmem %s3, %s865
      %p867 = scmp.lt.s32.totalorder %s20, 1
      %s868 = scalar_select %p867, %s20, 1
      %s869 = smul.addr %s868, 8
      %s870 = scalar_lea.vmem %s4, %s869
      // Predicated region
      $region33: #{decoder_block_forward.2} parent=27 // pred_check
        %p871 = pneg %p97
      $region34: #{decoder_block_forward.2} parent=27 // pred_check_branch
        %873 = sbr.rel (%p871) target = $region36
      $region35: #{decoder_block_forward.2} parent=27 // pred_region
        %s874 = sadd.s32 %s20, %s21
        %s875 = smul.u32 32, %s874
      $region36: #{decoder_block_forward.2} parent=27 // pred_fallthru
        _
      // Predicated region
      $region37: #{decoder_block_forward.2} parent=27 // pred_check
        %p876 = pneg %p123
      $region38: #{decoder_block_forward.2} parent=27 // pred_check_branch
        %878 = sbr.rel (%p876) target = $region40
      $region39: #{decoder_block_forward.2} parent=27 // pred_region
        _
      $region40: #{decoder_block_forward.2} parent=27 // pred_fallthru
        _
      // Predicated region
      $region41: #{decoder_block_forward.2} parent=27 // pred_check
        %p879 = pneg %p149
      $region42: #{decoder_block_forward.2} parent=27 // pred_check_branch
        %881 = sbr.rel (%p879) target = $region44
      $region43: #{decoder_block_forward.2} parent=27 // pred_region
        _
      $region44: #{decoder_block_forward.2} parent=27 // pred_fallthru
        _
    $region28: #{decoder_block_forward.2} parent=5 // pred_fallthru
      _
    %p882 = scmp.le.s32.totalorder 2, %s11
    // Predicated region
    $region45: #{decoder_block_forward.2} parent=5 // pred_check
      %p883 = pneg %p882
    $region46: #{decoder_block_forward.2} parent=5 // pred_check_branch
      %885 = sbr.rel (%p883) target = $region48
    $region47: #{decoder_block_forward.2} parent=5 // pred_region
      %s886 = ssub.s32 %s11, 2
      // Predicated region
      $region49: #{decoder_block_forward.2} parent=47 // pred_check
        %p887 = pneg %p103
      $region50: #{decoder_block_forward.2} parent=47 // pred_check_branch
        %889 = sbr.rel (%p887) target = $region52
      $region51: #{decoder_block_forward.2} parent=47 // pred_region
        %s890 = sadd.s32 %s22, %s23
        %s891 = smul.u32 32, %s890
        %p892 = scmp.lt.s32.totalorder %s891, 63
        %s893 = scalar_select %p892, %s891, 63
        %s894 = smul.addr %s893, 8
        %s895 = scalar_lea.vmem %s2, %s894
      $region52: #{decoder_block_forward.2} parent=47 // pred_fallthru
        _
      // Predicated region
      $region53: #{decoder_block_forward.2} parent=47 // pred_check
        %p896 = pneg %p129
      $region54: #{decoder_block_forward.2} parent=47 // pred_check_branch
        %898 = sbr.rel (%p896) target = $region56
      $region55: #{decoder_block_forward.2} parent=47 // pred_region
        %p899 = scmp.lt.s32.totalorder %s22, 1
        %s900 = scalar_select %p899, %s22, 1
        %s901 = smul.addr %s900, 8
        %s902 = scalar_lea.vmem %s3, %s901
      $region56: #{decoder_block_forward.2} parent=47 // pred_fallthru
        _
      // Predicated region
      $region57: #{decoder_block_forward.2} parent=47 // pred_check
        %p903 = pneg %p155
      $region58: #{decoder_block_forward.2} parent=47 // pred_check_branch
        %905 = sbr.rel (%p903) target = $region60
      $region59: #{decoder_block_forward.2} parent=47 // pred_region
        %p906 = scmp.lt.s32.totalorder %s22, 1
        %s907 = scalar_select %p906, %s22, 1
        %s908 = smul.addr %s907, 8
        %s909 = scalar_lea.vmem %s4, %s908
      $region60: #{decoder_block_forward.2} parent=47 // pred_fallthru
        _
    $region48: #{decoder_block_forward.2} parent=5 // pred_fallthru
      _
  $region6: #{decoder_block_forward.2} parent=0 // loop_footer
    %s15 = sadd.s32 1, %s11
  $region7: #{decoder_block_forward.2} parent=0 // loop_footer_branch
    %10 = sbr.rel target = $region3
  $region8: #{decoder_block_forward.2} parent=0 // loop_exit
    _

</llo_original>
